<compile_context>
chip_gen: v7x
topology: tpu7x:2x2x1
jax: 0.10.0
libtpu: 0.0.40
codegen_flags: <defaults>
</compile_context>

<pallas_src>
import functools
import math

import jax
import jax.numpy as jnp
from jax.experimental import pallas as pl
from jax.experimental.pallas import tpu as pltpu


def _kv_loss_kernel(mid_ref, out_ref, part_ref, *, alpha, beta, gamma, eps,
                    rows_total, cols_total, tm, tv, need_row_mask, need_col_mask):
    j = pl.program_id(1)   # vocab tile (reduction axis, innermost, 'arbitrary')

    # Upcast on the loaded tile (inputs stream in native dtype; bf16 halves HBM traffic).
    mid = mid_ref[...].astype(jnp.float32)
    out = out_ref[...].astype(jnp.float32)

    m = 0.5 * (mid + out)
    half_beta = 0.5 * beta
    # Shared-log / no-divide rewrite of alpha*CE + beta*JS + gamma*L1 (3 logs, 0 divides per elem).
    g = (half_beta * mid * jnp.log(mid + eps)
         + (half_beta * out - alpha * mid) * jnp.log(out + eps)
         - beta * m * jnp.log(m + eps)
         + gamma * jnp.abs(mid - out))

    # Ragged-tail masking with cheap 1-D iotas; done after the logs (where is a select, so any
    # NaN/Inf computed on padding garbage is discarded, never propagated).
    if need_row_mask or need_col_mask:
        mask = None
        if need_row_mask:
            i = pl.program_id(0)
            r = jax.lax.broadcasted_iota(jnp.int32, (tm, 1), 0) + i * tm
            mask = r < rows_total
        if need_col_mask:
            c = jax.lax.broadcasted_iota(jnp.int32, (1, tv), 1) + j * tv
            cmask = c < cols_total
            mask = cmask if mask is None else jnp.logical_and(mask, cmask)
        g = jnp.where(mask, g, 0.0)

    # Column-sums only (no cross-lane reduce in the grid loop); accumulator stays lane-shaped.
    partial = jnp.sum(g, axis=0, keepdims=True).reshape(1, 1, tv)

    @pl.when(j == 0)
    def _init():
        part_ref[...] = jnp.zeros_like(part_ref)

    part_ref[...] = part_ref[...] + partial


def _sublane_multiple(dtype) -> int:
    # Min second-to-last tile dim: 8 for 4-byte, 16 for 2-byte, 32 for 1-byte dtypes.
    return max(8, 32 // jnp.dtype(dtype).itemsize)


def kv_cache_compression_loss(mid_probs, output_probs, *, alpha=1.0, beta=1.0,
                              epsilon=1e-8, label_strategy="logit",
                              block_rows=512, block_cols=2048):
    """Pallas implementation of KVCacheCompressionLoss.forward (label_strategy='logit')."""
    if label_strategy != "logit":
        # TODO(synk): 'label' / 'label_twice' / 'label_confident' need an argmax->one-hot CE
        # (running row-max across vocab tiles); only the default 'logit' branch is fused here.
        raise NotImplementedError("only label_strategy='logit' is implemented")

    v = mid_probs.shape[-1]
    rows = math.prod(mid_probs.shape[:-1])
    # No dtype cast in the wrapper: keep native dtype (e.g. bf16) in HBM, cast inside the kernel.
    mid2 = mid_probs.reshape(rows, v)
    out2 = output_probs.reshape(rows, v)

    sub_mult = max(_sublane_multiple(mid2.dtype), _sublane_multiple(out2.dtype))
    block_rows = max(sub_mult, (block_rows // sub_mult) * sub_mult)
    block_cols = max(128, (block_cols // 128) * 128)

    # Block shapes: full dim when small (always legal), otherwise aligned tiles.
    tm = rows if rows <= block_rows else block_rows
    tv = v if v <= block_cols else block_cols
    nm = pl.cdiv(rows, tm)
    # v7x: make sure the 'parallel' row-tile axis has >= 2 entries so both TensorCores get work.
    if nm == 1 and rows >= 2 * sub_mult:
        tm = sub_mult * pl.cdiv(pl.cdiv(rows, 2), sub_mult)
        nm = pl.cdiv(rows, tm)
    nv = pl.cdiv(v, tv)

    need_row_mask = (rows % tm) != 0
    need_col_mask = (v % tv) != 0

    kernel = functools.partial(
        _kv_loss_kernel,
        alpha=float(alpha), beta=float(beta), gamma=float(1.0 - alpha - beta),
        eps=float(epsilon), rows_total=rows, cols_total=v, tm=tm, tv=tv,
        need_row_mask=need_row_mask, need_col_mask=need_col_mask)

    # Scoped-VMEM budget: 2 inputs x 2 pipeline buffers x tile (+ small accumulator).  Raise the
    # limit past v5e's 16 MiB default, cap at 64 MiB so we never exceed v7x physical VMEM.
    in_bytes = 2 * tm * tv * (mid2.dtype.itemsize + out2.dtype.itemsize)
    vmem_limit = int(min(64 << 20, max(32 << 20, int(in_bytes * 1.5) + (4 << 20))))

    in_spec = pl.BlockSpec((tm, tv), lambda i, j: (i, j))
    partials = pl.pallas_call(
        kernel,
        out_shape=jax.ShapeDtypeStruct((nm, 1, tv), jnp.float32),
        grid=(nm, nv),
        in_specs=[in_spec, in_spec],
        out_specs=pl.BlockSpec((1, 1, tv), lambda i, j: (i, 0, 0)),
        compiler_params=pltpu.CompilerParams(
            dimension_semantics=("parallel", "arbitrary"),
            vmem_limit_bytes=vmem_limit),
    )(mid2, out2)

    # Tiny final combine (nm * tv floats) + the mean-over-rows scale.
    return jnp.sum(partials) * (1.0 / float(rows))


def _loss_ref(mid, out, alpha=1.0, beta=1.0, eps=1e-8):
    """Pure-JAX reference mirroring the PyTorch module exactly (division-form JS)."""
    ce = -jnp.sum(mid * jnp.log(out + eps), axis=-1).mean()
    m = 0.5 * (mid + out)
    js = 0.5 * (jnp.sum(mid * jnp.log(mid / m + eps), axis=-1) +
                jnp.sum(out * jnp.log(out / m + eps), axis=-1)).mean()
    l1 = jnp.abs(mid - out).sum(axis=-1).mean()
    return alpha * ce + beta * js + (1.0 - alpha - beta) * l1


if __name__ == "__main__":
    key = jax.random.PRNGKey(0)
    cases = [
        ((2, 8, 128), jnp.float32, {}),                                      # tiny; 2-row-tile guard
        ((2, 300, 640), jnp.float32, {}),                                    # ragged row tail
        ((2, 300, 640), jnp.float32, dict(block_rows=256, block_cols=512)),  # ragged row + col tails
        ((2, 64, 256), jnp.bfloat16, {}),                                    # native bf16 streaming
    ]
    for (b, s, v), dt, kw in cases:
        key, k1, k2 = jax.random.split(key, 3)
        mid_probs = jax.nn.softmax(
            jax.random.normal(k1, (b, s, v), jnp.float32), axis=-1).astype(dt)
        output_probs = jax.nn.softmax(
            jax.random.normal(k2, (b, s, v), jnp.float32), axis=-1).astype(dt)

        loss = jax.block_until_ready(kv_cache_compression_loss(mid_probs, output_probs, **kw))
        ref = jax.block_until_ready(
            _loss_ref(mid_probs.astype(jnp.float32), output_probs.astype(jnp.float32)))

        assert bool(jnp.isfinite(loss)), (dt, float(loss))
        assert bool(jnp.allclose(loss, ref, rtol=1e-4, atol=1e-4)), (dt, float(loss), float(ref))

    print("KERNEL_OK")
</pallas_src>

<mosaic_0001>
module attributes {stable_mosaic.version = 11 : i64} {
  func.func @_kv_loss_kernel(%arg0: i32, %arg1: i32, %arg2: memref<8x128xf32, #tpu.memory_space<vmem>>, %arg3: memref<8x128xf32, #tpu.memory_space<vmem>>, %arg4: memref<1x1x128xf32, #tpu.memory_space<vmem>>) attributes {dimension_semantics = [#tpu.dimension_semantics<parallel>, #tpu.dimension_semantics<arbitrary>], iteration_bounds = array<i64: 2, 1>, scalar_prefetch = 0 : i64, scratch_operands = 0 : i64, tpu.core_type = #tpu.core_type<tc>, window_params = [{transform_indices = @transform_0, window_bounds = array<i64: 8, 128>}, {transform_indices = @transform_1, window_bounds = array<i64: 8, 128>}, {transform_indices = @transform_2, window_bounds = array<i64: 1, 1, 128>}]} {
    %c0 = arith.constant 0 : index
    %c0_0 = arith.constant 0 : index
    %0 = vector.load %arg2[%c0, %c0_0] : memref<8x128xf32, #tpu.memory_space<vmem>>, vector<8x128xf32>
    %c0_1 = arith.constant 0 : index
    %c0_2 = arith.constant 0 : index
    %1 = vector.load %arg3[%c0_1, %c0_2] : memref<8x128xf32, #tpu.memory_space<vmem>>, vector<8x128xf32>
    %2 = arith.addf %0, %1 : vector<8x128xf32>
    %cst = arith.constant 5.000000e-01 : f32
    %3 = vector.broadcast %cst : f32 to vector<8x128xf32>
    %4 = arith.mulf %3, %2 : vector<8x128xf32>
    %cst_3 = arith.constant 5.000000e-01 : f32
    %5 = vector.broadcast %cst_3 : f32 to vector<8x128xf32>
    %6 = arith.mulf %5, %0 : vector<8x128xf32>
    %cst_4 = arith.constant 9.99999993E-9 : f32
    %7 = vector.broadcast %cst_4 : f32 to vector<8x128xf32>
    %8 = arith.addf %0, %7 : vector<8x128xf32>
    %9 = math.log %8 : vector<8x128xf32>
    %10 = arith.mulf %6, %9 : vector<8x128xf32>
    %cst_5 = arith.constant 5.000000e-01 : f32
    %11 = vector.broadcast %cst_5 : f32 to vector<8x128xf32>
    %12 = arith.mulf %11, %1 : vector<8x128xf32>
    %cst_6 = arith.constant 1.000000e+00 : f32
    %13 = vector.broadcast %cst_6 : f32 to vector<8x128xf32>
    %14 = arith.mulf %13, %0 : vector<8x128xf32>
    %15 = arith.subf %12, %14 : vector<8x128xf32>
    %cst_7 = arith.constant 9.99999993E-9 : f32
    %16 = vector.broadcast %cst_7 : f32 to vector<8x128xf32>
    %17 = arith.addf %1, %16 : vector<8x128xf32>
    %18 = math.log %17 : vector<8x128xf32>
    %19 = arith.mulf %15, %18 : vector<8x128xf32>
    %20 = arith.addf %10, %19 : vector<8x128xf32>
    %cst_8 = arith.constant 1.000000e+00 : f32
    %21 = vector.broadcast %cst_8 : f32 to vector<8x128xf32>
    %22 = arith.mulf %21, %4 : vector<8x128xf32>
    %cst_9 = arith.constant 9.99999993E-9 : f32
    %23 = vector.broadcast %cst_9 : f32 to vector<8x128xf32>
    %24 = arith.addf %4, %23 : vector<8x128xf32>
    %25 = math.log %24 : vector<8x128xf32>
    %26 = arith.mulf %22, %25 : vector<8x128xf32>
    %27 = arith.subf %20, %26 : vector<8x128xf32>
    %28 = arith.subf %0, %1 : vector<8x128xf32>
    %29 = math.absf %28 : vector<8x128xf32>
    %cst_10 = arith.constant -1.000000e+00 : f32
    %30 = vector.broadcast %cst_10 : f32 to vector<8x128xf32>
    %31 = arith.mulf %30, %29 : vector<8x128xf32>
    %32 = arith.addf %27, %31 : vector<8x128xf32>
    %cst_11 = arith.constant dense<0.000000e+00> : vector<128xf32>
    %33 = vector.multi_reduction <add>, %32, %cst_11 [0] : vector<8x128xf32> to vector<128xf32>
    %34 = vector.shape_cast %33 : vector<128xf32> to vector<1x128xf32>
    %35 = vector.shape_cast %34 : vector<1x128xf32> to vector<1x1x128xf32>
    %c0_i32 = arith.constant 0 : i32
    %36 = arith.cmpi eq, %arg1, %c0_i32 : i32
    %37 = arith.extui %36 : i1 to i32
    %c0_i32_12 = arith.constant 0 : i32
    %38 = arith.cmpi ne, %37, %c0_i32_12 : i32
    scf.if %38 {
      %cst_19 = arith.constant 0.000000e+00 : f32
      %42 = vector.broadcast %cst_19 : f32 to vector<1x1x128xf32>
      %c0_20 = arith.constant 0 : index
      %c0_21 = arith.constant 0 : index
      %c0_22 = arith.constant 0 : index
      %43 = vector.load %arg4[%c0_20, %c0_21, %c0_22] : memref<1x1x128xf32, #tpu.memory_space<vmem>>, vector<1x1x128xf32>
      tpu.vector_store %arg4[%c0_20, %c0_21, %c0_22], %42 {strides = array<i32>} : memref<1x1x128xf32, #tpu.memory_space<vmem>>, vector<1x1x128xf32>,
    } else {
    }
    %c0_13 = arith.constant 0 : index
    %c0_14 = arith.constant 0 : index
    %c0_15 = arith.constant 0 : index
    %39 = vector.load %arg4[%c0_13, %c0_14, %c0_15] : memref<1x1x128xf32, #tpu.memory_space<vmem>>, vector<1x1x128xf32>
    %40 = arith.addf %39, %35 : vector<1x1x128xf32>
    %c0_16 = arith.constant 0 : index
    %c0_17 = arith.constant 0 : index
    %c0_18 = arith.constant 0 : index
    %41 = vector.load %arg4[%c0_16, %c0_17, %c0_18] : memref<1x1x128xf32, #tpu.memory_space<vmem>>, vector<1x1x128xf32>
    tpu.vector_store %arg4[%c0_16, %c0_17, %c0_18], %40 {strides = array<i32>} : memref<1x1x128xf32, #tpu.memory_space<vmem>>, vector<1x1x128xf32>,
    return
  }
  func.func @transform_0(%arg0: i32, %arg1: i32) -> (i32, i32) {
    %c0_i32 = arith.constant 0 : i32
    return %arg0, %arg1 : i32, i32
  }
  func.func @transform_1(%arg0: i32, %arg1: i32) -> (i32, i32) {
    %c0_i32 = arith.constant 0 : i32
    return %arg0, %arg1 : i32, i32
  }
  func.func @transform_2(%arg0: i32, %arg1: i32) -> (i32, i32, i32) {
    %c0_i32 = arith.constant 0 : i32
    %c0_i32_0 = arith.constant 0 : i32
    %c0_i32_1 = arith.constant 0 : i32
    return %arg0, %c0_i32, %c0_i32_0 : i32, i32, i32
  }
}

</mosaic_0001>

<llo_original>
// kernel: tpu_custom_call.1
$region0: #{tpu_custom_call.1}
  #allocation0 [shape = 'u32[]', space=smem, size = 0x4, offset = 0x4, fixed_abs, tag = 'smem constant byte address 0x4 - core index']
  #allocation1 [shape = 'u32[144,128]{1,0:T(1,128)}', space=vmem, size = 0x12000, scoped, tag = 'internal scratch']
  %s0 = inlined_call_operand.hbm [shape: f32[16,128], index: 0, kind: input, shape index: {}]
  %s1 = inlined_call_operand.hbm [shape: f32[16,128], index: 1, kind: input, shape index: {}]
  %s2 = inlined_call_operand.hbm [shape: f32[2,1,128], index: 2, kind: output, shape index: {}]
  %s3 = sld [smem:[#allocation0]]
  $region53: #{tpu_custom_call.1} parent=0
    _
  %s5 = ssub.s32 1, %s3
  %s6 = scalar_select 0, %s5, %s3
  $region1: #{tpu_custom_call.1} parent=0
    #allocation2 [shape = 'u8[8192]{0}', space=vmem, size = 0x2000, scoped, tag = 'input window, operand 0']
    #allocation3 [shape = 's32[2]{0}', space=sflag, size = 0x8, scoped, tag = 'scoped memory for tpu_custom_call.1']
    #allocation4 [shape = 's32[2]{0}', space=sflag, size = 0x8, scoped, tag = 'scoped memory for tpu_custom_call.1']
    #allocation5 [shape = 'u8[8192]{0}', space=vmem, size = 0x2000, scoped, tag = 'input window, operand 1']
    #allocation6 [shape = 's32[2]{0}', space=sflag, size = 0x8, scoped, tag = 'scoped memory for tpu_custom_call.1']
    #allocation7 [shape = 'u8[1024]{0}', space=vmem, size = 0x400, scoped, tag = 'output window, operand 0']
    %7 = vsyncpa [#allocation3], 0
    %s8 = scalar_lea.sflag [#allocation3], 1
    %9 = vsyncpa %s8, 0
    %10 = vsyncpa [#allocation6], 0
    %s11 = scalar_lea.sflag [#allocation6], 1
    %12 = vsyncpa %s11, 0
    %13 = vsyncpa [#allocation4], 0
    %s14 = scalar_lea.sflag [#allocation4], 1
    %15 = vsyncpa %s14, 0
    loop: start=0, step=1, limit=4
    $region2: #{tpu_custom_call.1} parent=1 // loop_pre_header
      _
    $region3: #{tpu_custom_call.1} parent=1 // loop_header
      %s17 = sphi 0, %s21
      %p18 = scmp.ge.s32.totalorder %s17, 4
      %s24 = sphi 0, %s36
      %s25 = sphi 0, %s32
      %s26 = sphi 0, %s24
      %s27 = sphi 0, %s25
      %s28 = sphi 0, %s26
      %s29 = sphi 0, %s27
      %s41 = sphi 0, %s43
      %s44 = sphi 0, %s41
      %s45 = sphi 0, %s44
      %s61 = sphi 0, %s45
      %s69 = sphi 0, %s71
      %s72 = sphi 0, %s69
      %s73 = sphi 0, %s72
      %s89 = sphi 0, %s73
      %s95 = sphi 0, %s97
      %s98 = sphi 0, %s95
      %s99 = sphi 0, %s98
      %s115 = sphi 0, %s99
    $region4: #{tpu_custom_call.1} parent=1 // loop_header_branch
      %20 = sbr.rel (%p18) target = $region8
    $region5: #{tpu_custom_call.1} parent=1 // loop_body
      %s22 = ssub.s32 %s17, 1
      %s23 = ssub.s32 %s17, 2
      %s30 = sadd.s32 1, %s25
      %p31 = scmp.ge.s32.totalorder %s30, 1
      %s32 = scalar_select %p31, 0, %s30
      %s33 = sadd.s32 1, %s24
      %s34 = scalar_select %p31, %s33, %s24
      %p35 = scmp.ge.s32.totalorder %s34, 2
      %s36 = scalar_select %p35, 0, %s34
      %s37 = ssub.s32 %s24, %s36
      %s38 = ssub.s32 %s25, %s32
      %s39 = sor.u32 %s37, %s38
      %p40 = scmp.eq.s32.totalorder %s39, 0
      %s42 = sadd.s32 %s41, 1
      %s43 = scalar_select %p40, %s41, %s42
      %p46 = pneg %p40
      %p47 = scmp.eq.s32.totalorder %s17, 1
      %p48 = por %p46, %p47
      %p49 = scmp.ne.s32.totalorder %s41, %s44
      %p50 = scmp.eq.s32.totalorder %s17, 0
      %p51 = por %p49, %p50
      %p52 = scmp.ne.s32.totalorder %s41, %s44
      %p53 = scmp.eq.s32.totalorder %s22, 1
      %p54 = por %p52, %p53
      %p55 = scmp.ne.s32.totalorder %s44, %s45
      %p56 = scmp.eq.s32.totalorder %s22, 0
      %p57 = por %p55, %p56
      %p58 = scmp.ne.s32.totalorder %s44, %s45
      %p59 = scmp.eq.s32.totalorder %s23, 1
      %p60 = por %p58, %p59
      %p62 = scmp.ne.s32.totalorder %s45, %s61
      %p63 = scmp.eq.s32.totalorder %s23, 0
      %p64 = por %p62, %p63
      %s65 = ssub.s32 %s24, %s36
      %s66 = ssub.s32 %s25, %s32
      %s67 = sor.u32 %s65, %s66
      %p68 = scmp.eq.s32.totalorder %s67, 0
      %s70 = sadd.s32 %s69, 1
      %s71 = scalar_select %p68, %s69, %s70
      %p74 = pneg %p68
      %p75 = scmp.eq.s32.totalorder %s17, 1
      %p76 = por %p74, %p75
      %p77 = scmp.ne.s32.totalorder %s69, %s72
      %p78 = scmp.eq.s32.totalorder %s17, 0
      %p79 = por %p77, %p78
      %p80 = scmp.ne.s32.totalorder %s69, %s72
      %p81 = scmp.eq.s32.totalorder %s22, 1
      %p82 = por %p80, %p81
      %p83 = scmp.ne.s32.totalorder %s72, %s73
      %p84 = scmp.eq.s32.totalorder %s22, 0
      %p85 = por %p83, %p84
      %p86 = scmp.ne.s32.totalorder %s72, %s73
      %p87 = scmp.eq.s32.totalorder %s23, 1
      %p88 = por %p86, %p87
      %p90 = scmp.ne.s32.totalorder %s73, %s89
      %p91 = scmp.eq.s32.totalorder %s23, 0
      %p92 = por %p90, %p91
      %s93 = ssub.s32 %s24, %s36
      %p94 = scmp.eq.s32.totalorder %s93, 0
      %s96 = sadd.s32 %s95, 1
      %s97 = scalar_select %p94, %s95, %s96
      %p100 = pneg %p94
      %p101 = scmp.eq.s32.totalorder %s17, 1
      %p102 = por %p100, %p101
      %p103 = scmp.ne.s32.totalorder %s95, %s98
      %p104 = scmp.eq.s32.totalorder %s17, 0
      %p105 = por %p103, %p104
      %p106 = scmp.ne.s32.totalorder %s95, %s98
      %p107 = scmp.eq.s32.totalorder %s22, 1
      %p108 = por %p106, %p107
      %p109 = scmp.ne.s32.totalorder %s98, %s99
      %p110 = scmp.eq.s32.totalorder %s22, 0
      %p111 = por %p109, %p110
      %p112 = scmp.ne.s32.totalorder %s98, %s99
      %p113 = scmp.eq.s32.totalorder %s23, 1
      %p114 = por %p112, %p113
      %p116 = scmp.ne.s32.totalorder %s99, %s115
      %p117 = scmp.eq.s32.totalorder %s23, 0
      %p118 = por %p116, %p117
      %p119 = scmp.le.s32.totalorder 1, %s17
      %p120 = scmp.lt.s32.totalorder %s17, 3
      %p121 = pnand %p119, %p120
      %p122 = pneg %p121
      // Predicated region
      $region9: #{tpu_custom_call.1} parent=5 // pred_check
        _
      $region10: #{tpu_custom_call.1} parent=5 // pred_check_branch
        %124 = sbr.rel (%p121) target = $region12
      $region11: #{tpu_custom_call.1} parent=5 // pred_region
        %s125 = ssub.s32 %s17, 1
      $region12: #{tpu_custom_call.1} parent=5 // pred_fallthru
        _
      %p126 = scmp.lt.s32.totalorder %s17, 2
      // Predicated region
      $region13: #{tpu_custom_call.1} parent=5 // pred_check
        %p127 = pneg %p126
      $region14: #{tpu_custom_call.1} parent=5 // pred_check_branch
        %129 = sbr.rel (%p127) target = $region16
      $region15: #{tpu_custom_call.1} parent=5 // pred_region
        // Predicated region
        $region17: #{tpu_custom_call.1} parent=15 // pred_check
          %p130 = pneg %p51
        $region18: #{tpu_custom_call.1} parent=15 // pred_check_branch
          %132 = sbr.rel (%p130) target = $region20
        $region19: #{tpu_custom_call.1} parent=15 // pred_region
          %s133 = sand.u32 %s41, 1
          %s134 = scalar_lea.sflag [#allocation3], %s133
          %s135 = sand.u32 %s41, 1
          %s136 = smul.addr %s135, 8
          %s137 = scalar_lea.vmem [#allocation2], %s136
          %s139 = ssub.s32 128, 128
          %140 = vsyncadd %s134, %s139
          %s141 = sadd.s32 %s25, %s24
          %s142 = smul.addr %s141, 128
          %s143 = scalar_lea.hbm %s0, %s142
          %s145 = sshll.u32 %s137, 4
          %s146 = int_to_ptr.vmem [resolvable:$true] %s145
          %148 = dma.hbm_to_vmem [thread:$0]  %s143, 128, %s146, %s134
        $region20: #{tpu_custom_call.1} parent=15 // pred_fallthru
          _
        // Predicated region
        $region21: #{tpu_custom_call.1} parent=15 // pred_check
          %p149 = pneg %p79
        $region22: #{tpu_custom_call.1} parent=15 // pred_check_branch
          %151 = sbr.rel (%p149) target = $region24
        $region23: #{tpu_custom_call.1} parent=15 // pred_region
          %s152 = sand.u32 %s69, 1
          %s153 = scalar_lea.sflag [#allocation6], %s152
          %s154 = sand.u32 %s69, 1
          %s155 = smul.addr %s154, 8
          %s156 = scalar_lea.vmem [#allocation5], %s155
          %s158 = ssub.s32 128, 128
          %159 = vsyncadd %s153, %s158
          %s160 = sadd.s32 %s25, %s24
          %s161 = smul.addr %s160, 128
          %s162 = scalar_lea.hbm %s1, %s161
          %s164 = sshll.u32 %s156, 4
          %s165 = int_to_ptr.vmem [resolvable:$true] %s164
          %167 = dma.hbm_to_vmem [thread:$0]  %s162, 128, %s165, %s153
        $region24: #{tpu_custom_call.1} parent=15 // pred_fallthru
          _
      $region16: #{tpu_custom_call.1} parent=5 // pred_fallthru
        _
      %p168 = scmp.le.s32.totalorder 1, %s17
      %p169 = scmp.lt.s32.totalorder %s17, 3
      %p170 = pnand %p168, %p169
      %p171 = pneg %p170
      // Predicated region
      $region25: #{tpu_custom_call.1} parent=5 // pred_check
        _
      $region26: #{tpu_custom_call.1} parent=5 // pred_check_branch
        %173 = sbr.rel (%p170) target = $region28
      $region27: #{tpu_custom_call.1} parent=5 // pred_region
        %s174 = ssub.s32 %s17, 1
        %s175 = sand.u32 %s44, 1
        %s176 = scalar_lea.sflag [#allocation3], %s175
        %s177 = sand.u32 %s44, 1
        %s178 = smul.addr %s177, 8
        %s179 = scalar_lea.vmem [#allocation2], %s178
        // Predicated region
        $region29: #{tpu_custom_call.1} parent=27 // pred_check
          %p180 = pneg %p57
        $region30: #{tpu_custom_call.1} parent=27 // pred_check_branch
          %182 = sbr.rel (%p180) target = $region32
        $region31: #{tpu_custom_call.1} parent=27 // pred_region
          %183 = dma.done %s176, 128
        $region32: #{tpu_custom_call.1} parent=27 // pred_fallthru
          _
        %s184 = sand.u32 %s72, 1
        %s185 = scalar_lea.sflag [#allocation6], %s184
        %s186 = sand.u32 %s72, 1
        %s187 = smul.addr %s186, 8
        %s188 = scalar_lea.vmem [#allocation5], %s187
        // Predicated region
        $region33: #{tpu_custom_call.1} parent=27 // pred_check
          %p189 = pneg %p85
        $region34: #{tpu_custom_call.1} parent=27 // pred_check_branch
          %191 = sbr.rel (%p189) target = $region36
        $region35: #{tpu_custom_call.1} parent=27 // pred_region
          %192 = dma.done %s185, 128
        $region36: #{tpu_custom_call.1} parent=27 // pred_fallthru
          _
        %s193 = sand.u32 %s44, 1
        %s194 = scalar_lea.sflag [#allocation3], %s193
        %s195 = sand.u32 %s44, 1
        %s196 = smul.addr %s195, 8
        %s197 = scalar_lea.vmem [#allocation2], %s196
        %p198 = pneg %p57
        %p199 = pneg %p54
        %s200 = sand.u32 %s72, 1
        %s201 = scalar_lea.sflag [#allocation6], %s200
        %s202 = sand.u32 %s72, 1
        %s203 = smul.addr %s202, 8
        %s204 = scalar_lea.vmem [#allocation5], %s203
        %p205 = pneg %p85
        %p206 = pneg %p82
        %p207 = pneg %p111
        %p208 = pneg %p108
        %s209 = sand.u32 %s98, 1
        %s210 = scalar_lea.sflag [#allocation4], %s209
        %s211 = sand.u32 %s98, 1
        %s212 = scalar_lea.vmem [#allocation7], %s211
        %v213 = vld [vmem:[%s179] sm:$0xff]
        %v214 = vld [vmem:[%s188] sm:$0xff]
        %v215 = vadd.f32 %v213, %v214
        %v216 = vmul.f32 %v215, 0.5
        %v217 = vmul.f32 %v213, 0.5
        %v218 = vadd.f32 %v213, 1e-08
        %v219 = vlog2.pop %v218
        %v220 = vmul.f32 %v219, 0.6931472
        %v221 = vmul.f32 %v217, %v220
        %v222 = vmul.f32 %v214, 0.5
        %v223 = vsub.f32 %v222, %v213
        %v224 = vadd.f32 %v214, 1e-08
        %v225 = vlog2.pop %v224
        %v226 = vmul.f32 %v225, 0.6931472
        %v227 = vmul.f32 %v223, %v226
        %v228 = vadd.f32 %v221, %v227
        %v229 = vadd.f32 %v216, 1e-08
        %v230 = vlog2.pop %v229
        %v231 = vmul.f32 %v230, 0.6931472
        %v232 = vmul.f32 %v216, %v231
        %v233 = vsub.f32 %v228, %v232
        %v234 = vsub.f32 %v213, %v214
        %v235 = vand.u32 2147483647, %v234
        %v236 = vmul.f32 %v235, -1.0
        %v237 = vadd.f32 %v233, %v236
        %v238 = vrot.slane %v237, 4
        %v239 = vadd.f32 %v237, %v238
        %v240 = vrot.slane %v239, 2
        %v241 = vadd.f32 %v239, %v240
        %v242 = vrot.slane %v241, 1
        %v243 = vadd.f32 %v241, %v242
        %p244 = scmp.eq.s32.totalorder %s27, 0
        // Predicated region
        $region37: #{tpu_custom_call.1} parent=27 // pred_check
          %p245 = pneg %p244
        $region38: #{tpu_custom_call.1} parent=27 // pred_check_branch
          %247 = sbr.rel (%p245) target = $region40
        $region39: #{tpu_custom_call.1} parent=27 // pred_region
          %248 = vst [vmem:[%s212] sm:$0x1] 0.0
        $region40: #{tpu_custom_call.1} parent=27 // pred_fallthru
          _
        %v249 = vld [vmem:[%s212] sm:$0x1]
        %v250 = vadd.f32 %v249, %v243
        %251 = vst [vmem:[%s212] sm:$0x1] %v250
        %s252 = sand.u32 %s98, 1
        %s253 = scalar_lea.sflag [#allocation4], %s252
        %s254 = sand.u32 %s98, 1
        %s255 = scalar_lea.vmem [#allocation7], %s254
        // Predicated region
        $region41: #{tpu_custom_call.1} parent=27 // pred_check
          %p256 = pneg %p108
        $region42: #{tpu_custom_call.1} parent=27 // pred_check_branch
          %258 = sbr.rel (%p256) target = $region44
        $region43: #{tpu_custom_call.1} parent=27 // pred_region
          %s260 = ssub.s32 16, 16
          %261 = vsyncadd %s253, %s260
          %s262 = smul.addr %s26, 16
          %s263 = scalar_lea.hbm %s2, %s262
          %s265 = sshll.u32 %s255, 4
          %s266 = int_to_ptr.vmem [resolvable:$true] %s265
          %268 = dma.vmem_to_hbm [thread:$0]  %s266, 16, %s263, %s253
        $region44: #{tpu_custom_call.1} parent=27 // pred_fallthru
          _
      $region28: #{tpu_custom_call.1} parent=5 // pred_fallthru
        _
      %p269 = scmp.le.s32.totalorder 2, %s17
      // Predicated region
      $region45: #{tpu_custom_call.1} parent=5 // pred_check
        %p270 = pneg %p269
      $region46: #{tpu_custom_call.1} parent=5 // pred_check_branch
        %272 = sbr.rel (%p270) target = $region48
      $region47: #{tpu_custom_call.1} parent=5 // pred_region
        %s273 = ssub.s32 %s17, 2
        // Predicated region
        $region49: #{tpu_custom_call.1} parent=47 // pred_check
          %p274 = pneg %p114
        $region50: #{tpu_custom_call.1} parent=47 // pred_check_branch
          %276 = sbr.rel (%p274) target = $region52
        $region51: #{tpu_custom_call.1} parent=47 // pred_region
          %s277 = sand.u32 %s99, 1
          %s278 = scalar_lea.sflag [#allocation4], %s277
          %s279 = sand.u32 %s99, 1
          %s280 = scalar_lea.vmem [#allocation7], %s279
          %281 = dma.done %s278, 16
        $region52: #{tpu_custom_call.1} parent=47 // pred_fallthru
          _
      $region48: #{tpu_custom_call.1} parent=5 // pred_fallthru
        _
    $region6: #{tpu_custom_call.1} parent=1 // loop_footer
      %s21 = sadd.s32 1, %s17
    $region7: #{tpu_custom_call.1} parent=1 // loop_footer_branch
      %16 = sbr.rel target = $region3
    $region8: #{tpu_custom_call.1} parent=1 // loop_exit
      _
    %282 = vsyncpa [#allocation3], 1
    %s283 = scalar_lea.sflag [#allocation3], 1
    %284 = vsyncpa %s283, 1
    %285 = vsyncpa [#allocation6], 1
    %s286 = scalar_lea.sflag [#allocation6], 1
    %287 = vsyncpa %s286, 1
    %288 = vsyncpa [#allocation4], 1
    %s289 = scalar_lea.sflag [#allocation4], 1
    %290 = vsyncpa %s289, 1

</llo_original>
